<compile_context>
chip_gen: v6e
topology: v6e:2x2x1
jax: 0.10.0
libtpu: 0.0.40
codegen_flags: <defaults>
</compile_context>

<pallas_src>
import functools

import jax
import jax.numpy as jnp
from jax import lax
from jax.experimental import pallas as pl
from jax.experimental.pallas import tpu as pltpu

# ----- small, module-consistent config (n_embed scaled down from 384) -------
B = 2            # batch
T = 16           # sequence length (<= block_size)
HEADS = 4        # head count
HS = 32          # per-head size
C = HEADS * HS   # n_embed for this small config (= 128, lane-dense)
NEG_INF = -1e30  # finite "minus infinity" (avoids -inf -> NaN through softmax)


# ---------------------------- Pallas kernel ---------------------------------
def mha_kernel(x_ref, wq_ref, wk_ref, wv_ref, wproj_ref, bproj_ref,
               sel_ref, bias_ref, o_ref, *, heads, head_size):
    x = x_ref[...]                                    # (N, C),  N = B*T

    # Fused projections for all heads (per-head weights stacked on output dim).
    q = jnp.dot(x, wq_ref[...], preferred_element_type=jnp.float32)   # (N, H*HS)
    k = jnp.dot(x, wk_ref[...], preferred_element_type=jnp.float32)
    v = jnp.dot(x, wv_ref[...], preferred_element_type=jnp.float32)

    # Block-diagonal K / V: row block h holds only head h's features.
    sel = sel_ref[...]                                # (H*N, H*HS) 0/1 selector
    kd = jnp.concatenate([k] * heads, axis=0) * sel   # (H*N, H*HS)
    vd = jnp.concatenate([v] * heads, axis=0) * sel   # (H*N, H*HS)

    # Scores for all heads and all batch rows in ONE MXU call:
    #   scores[n, h*N + m] = q_h[n] . k_h[m]
    scores = lax.dot_general(q, kd, (((1,), (1,)), ((), ())),
                             preferred_element_type=jnp.float32)      # (N, H*N)
    scores = scores * (head_size ** -0.5) + bias_ref[...]   # additive causal/batch mask

    # Segmented softmax: subtracting the global row max (>= every per-head
    # segment max) keeps exp() <= 1 and cancels inside each head segment.
    m = jnp.max(scores, axis=-1, keepdims=True)
    e = jnp.exp(scores - m)                            # masked lanes -> exactly 0
    numer = jnp.dot(e, vd, preferred_element_type=jnp.float32)    # (N, H*HS)
    denom = jnp.dot(e, sel, preferred_element_type=jnp.float32)   # per-head softmax sums
    att = numer / denom                                # == concat_h(softmax_h @ v_h)

    # Output projection (dropout = identity in eval mode).
    o_ref[...] = (jnp.dot(att, wproj_ref[...], preferred_element_type=jnp.float32)
                  + bproj_ref[...])


# ------------------------------ wrapper --------------------------------------
def _attention_constants(batch, seq, heads, head_size):
    """Constant head selector + additive causal/batch bias (wrapper-side)."""
    n = batch * seq
    # Block-diagonal selector: sel[h*n + m, hh*hs + d] = (h == hh).
    row_head = jnp.repeat(jnp.arange(heads), n)
    col_head = jnp.repeat(jnp.arange(heads), head_size)
    sel = (row_head[:, None] == col_head[None, :]).astype(jnp.float32)   # (H*n, H*hs)

    # Additive bias: 0 where (same batch element AND causal), else -1e30.
    qrow = jnp.arange(n)
    krow = jnp.tile(jnp.arange(n), heads)              # key row behind each score column
    same_batch = (qrow[:, None] // seq) == (krow[None, :] // seq)
    causal = (qrow[:, None] % seq) >= (krow[None, :] % seq)
    bias = jnp.where(same_batch & causal, 0.0, NEG_INF).astype(jnp.float32)  # (n, H*n)
    return sel, bias


@jax.jit
def mha_forward(x, params):
    """x: (B, T, C) float32 -> (B, T, C).  Multi-head causal self-attention."""
    b, t, c = x.shape
    n = b * t
    sel, bias = _attention_constants(b, t, HEADS, HS)

    kernel = functools.partial(mha_kernel, heads=HEADS, head_size=HS)
    vmem_spec = pl.BlockSpec(memory_space=pltpu.MemorySpace.VMEM)

    out2 = pl.pallas_call(
        kernel,
        out_shape=jax.ShapeDtypeStruct((n, c), jnp.float32),
        in_specs=[vmem_spec] * 8,
        out_specs=vmem_spec,
    )(x.reshape(n, c),
      params["wq"], params["wk"], params["wv"],
      params["wproj"], params["bproj"],
      sel, bias)
    return out2.reshape(b, t, c)


# -------------------- pure-JAX reference (mirrors PyTorch) -------------------
def mha_reference(x, p):
    b, t, c = x.shape
    q = x @ p["wq"]
    k = x @ p["wk"]
    v = x @ p["wv"]
    causal = jnp.tril(jnp.ones((t, t), bool))
    outs = []
    for h in range(HEADS):
        sl = slice(h * HS, (h + 1) * HS)
        qh, kh, vh = q[..., sl], k[..., sl], v[..., sl]
        wei = jnp.einsum("btd,bsd->bts", qh, kh) * (HS ** -0.5)
        wei = jnp.where(causal, wei, -jnp.inf)
        wei = jax.nn.softmax(wei, axis=-1)
        outs.append(jnp.einsum("bts,bsd->btd", wei, vh))
    att = jnp.concatenate(outs, axis=-1)
    return att @ p["wproj"] + p["bproj"]


# ------------------------- deterministic parameters --------------------------
def init_params(key):
    keys = jax.random.split(key, 5)
    s = 0.05
    return {
        "wq": s * jax.random.normal(keys[0], (C, HEADS * HS), jnp.float32),
        "wk": s * jax.random.normal(keys[1], (C, HEADS * HS), jnp.float32),
        "wv": s * jax.random.normal(keys[2], (C, HEADS * HS), jnp.float32),
        "wproj": s * jax.random.normal(keys[3], (HEADS * HS, C), jnp.float32),
        "bproj": s * jax.random.normal(keys[4], (1, C), jnp.float32),
    }


if __name__ == "__main__":
    key = jax.random.PRNGKey(0)
    pkey, xkey = jax.random.split(key)
    params = init_params(pkey)
    x = jax.random.normal(xkey, (B, T, C), jnp.float32)

    out = jax.block_until_ready(mha_forward(x, params))
    ref = mha_reference(x, params)

    assert out.shape == (B, T, C)
    max_err = float(jnp.max(jnp.abs(out - ref)))
    assert jnp.allclose(out, ref, atol=1e-4, rtol=1e-4), max_err
    print("KERNEL_OK")
</pallas_src>

<mosaic_0001>
module attributes {stable_mosaic.version = 11 : i64} {
  func.func @mha_kernel(%arg0: memref<32x128xf32, #tpu.memory_space<vmem>>, %arg1: memref<128x128xf32, #tpu.memory_space<vmem>>, %arg2: memref<128x128xf32, #tpu.memory_space<vmem>>, %arg3: memref<128x128xf32, #tpu.memory_space<vmem>>, %arg4: memref<128x128xf32, #tpu.memory_space<vmem>>, %arg5: memref<1x128xf32, #tpu.memory_space<vmem>>, %arg6: memref<128x128xf32, #tpu.memory_space<vmem>>, %arg7: memref<32x128xf32, #tpu.memory_space<vmem>>, %arg8: memref<32x128xf32, #tpu.memory_space<vmem>>) attributes {dimension_semantics = [], scalar_prefetch = 0 : i64, scratch_operands = 0 : i64, tpu.core_type = #tpu.core_type<tc>} {
    %c0 = arith.constant 0 : index
    %c0_0 = arith.constant 0 : index
    %0 = vector.load %arg0[%c0, %c0_0] : memref<32x128xf32, #tpu.memory_space<vmem>>, vector<32x128xf32>
    %c0_1 = arith.constant 0 : index
    %c0_2 = arith.constant 0 : index
    %1 = vector.load %arg1[%c0_1, %c0_2] : memref<128x128xf32, #tpu.memory_space<vmem>>, vector<128x128xf32>
    %cst = arith.constant dense<0.000000e+00> : vector<32x128xf32>
    %2 = tpu.matmul %0, %1, %cst {dimension_numbers = #tpu.dot_dimension_numbers<[1], [0], [0], [1], [0, 0, 1, 1], [], []>} : vector<32x128xf32>, vector<128x128xf32>, vector<32x128xf32> -> vector<32x128xf32>
    %c0_3 = arith.constant 0 : index
    %c0_4 = arith.constant 0 : index
    %3 = vector.load %arg2[%c0_3, %c0_4] : memref<128x128xf32, #tpu.memory_space<vmem>>, vector<128x128xf32>
    %cst_5 = arith.constant dense<0.000000e+00> : vector<32x128xf32>
    %4 = tpu.matmul %0, %3, %cst_5 {dimension_numbers = #tpu.dot_dimension_numbers<[1], [0], [0], [1], [0, 0, 1, 1], [], []>} : vector<32x128xf32>, vector<128x128xf32>, vector<32x128xf32> -> vector<32x128xf32>
    %c0_6 = arith.constant 0 : index
    %c0_7 = arith.constant 0 : index
    %5 = vector.load %arg3[%c0_6, %c0_7] : memref<128x128xf32, #tpu.memory_space<vmem>>, vector<128x128xf32>
    %cst_8 = arith.constant dense<0.000000e+00> : vector<32x128xf32>
    %6 = tpu.matmul %0, %5, %cst_8 {dimension_numbers = #tpu.dot_dimension_numbers<[1], [0], [0], [1], [0, 0, 1, 1], [], []>} : vector<32x128xf32>, vector<128x128xf32>, vector<32x128xf32> -> vector<32x128xf32>
    %c0_9 = arith.constant 0 : index
    %c0_10 = arith.constant 0 : index
    %7 = vector.load %arg6[%c0_9, %c0_10] : memref<128x128xf32, #tpu.memory_space<vmem>>, vector<128x128xf32>
    %8 = tpu.concatenate %4, %4, %4, %4 in 0 : vector<32x128xf32>, vector<32x128xf32>, vector<32x128xf32>, vector<32x128xf32> -> vector<128x128xf32>
    %9 = arith.mulf %8, %7 : vector<128x128xf32>
    %10 = tpu.concatenate %6, %6, %6, %6 in 0 : vector<32x128xf32>, vector<32x128xf32>, vector<32x128xf32>, vector<32x128xf32> -> vector<128x128xf32>
    %11 = arith.mulf %10, %7 : vector<128x128xf32>
    %cst_11 = arith.constant dense<0.000000e+00> : vector<32x128xf32>
    %12 = tpu.matmul %2, %9, %cst_11 {dimension_numbers = #tpu.dot_dimension_numbers<[1], [1], [0], [0], [0, 0, 1, 0], [], []>} : vector<32x128xf32>, vector<128x128xf32>, vector<32x128xf32> -> vector<32x128xf32>
    %cst_12 = arith.constant 0.176776692 : f32
    %13 = vector.broadcast %cst_12 : f32 to vector<32x128xf32>
    %14 = arith.mulf %12, %13 : vector<32x128xf32>
    %c0_13 = arith.constant 0 : index
    %c0_14 = arith.constant 0 : index
    %15 = vector.load %arg7[%c0_13, %c0_14] : memref<32x128xf32, #tpu.memory_space<vmem>>, vector<32x128xf32>
    %16 = arith.addf %14, %15 : vector<32x128xf32>
    %cst_15 = arith.constant dense<0xFF800000> : vector<32xf32>
    %17 = vector.multi_reduction <maximumf>, %16, %cst_15 [1] : vector<32x128xf32> to vector<32xf32>
    %18 = vector.shape_cast %17 : vector<32xf32> to vector<32x1xf32>
    %19 = vector.broadcast %18 : vector<32x1xf32> to vector<32x128xf32>
    %20 = arith.subf %16, %19 : vector<32x128xf32>
    %21 = math.exp %20 : vector<32x128xf32>
    %cst_16 = arith.constant dense<0.000000e+00> : vector<32x128xf32>
    %22 = tpu.matmul %21, %11, %cst_16 {dimension_numbers = #tpu.dot_dimension_numbers<[1], [0], [0], [1], [0, 0, 1, 1], [], []>} : vector<32x128xf32>, vector<128x128xf32>, vector<32x128xf32> -> vector<32x128xf32>
    %cst_17 = arith.constant dense<0.000000e+00> : vector<32x128xf32>
    %23 = tpu.matmul %21, %7, %cst_17 {dimension_numbers = #tpu.dot_dimension_numbers<[1], [0], [0], [1], [0, 0, 1, 1], [], []>} : vector<32x128xf32>, vector<128x128xf32>, vector<32x128xf32> -> vector<32x128xf32>
    %24 = arith.divf %22, %23 : vector<32x128xf32>
    %c0_18 = arith.constant 0 : index
    %c0_19 = arith.constant 0 : index
    %25 = vector.load %arg4[%c0_18, %c0_19] : memref<128x128xf32, #tpu.memory_space<vmem>>, vector<128x128xf32>
    %cst_20 = arith.constant dense<0.000000e+00> : vector<32x128xf32>
    %26 = tpu.matmul %24, %25, %cst_20 {dimension_numbers = #tpu.dot_dimension_numbers<[1], [0], [0], [1], [0, 0, 1, 1], [], []>} : vector<32x128xf32>, vector<128x128xf32>, vector<32x128xf32> -> vector<32x128xf32>
    %c0_21 = arith.constant 0 : index
    %c0_22 = arith.constant 0 : index
    %27 = vector.load %arg5[%c0_21, %c0_22] : memref<1x128xf32, #tpu.memory_space<vmem>>, vector<1x128xf32>
    %28 = vector.broadcast %27 : vector<1x128xf32> to vector<32x128xf32>
    %29 = arith.addf %26, %28 : vector<32x128xf32>
    %c0_23 = arith.constant 0 : index
    %c0_24 = arith.constant 0 : index
    %30 = vector.load %arg8[%c0_23, %c0_24] : memref<32x128xf32, #tpu.memory_space<vmem>>, vector<32x128xf32>
    tpu.vector_store %arg8[%c0_23, %c0_24], %29 {strides = array<i32>} : memref<32x128xf32, #tpu.memory_space<vmem>>, vector<32x128xf32>,
    return
  }
}

</mosaic_0001>

<llo_original>
// kernel: mha_forward.1
$region0: #{mha_forward.1}
  #allocation0 [shape = 'u32[]', space=smem, size = 0x4, offset = 0x4, fixed_abs, tag = 'smem constant byte address 0x4 - core index']
  #allocation1 [shape = 'u32[144,128]{1,0:T(1,128)}', space=vmem, size = 0x12000, scoped, tag = 'internal scratch']
  %s0 = inlined_call_operand.vmem [shape: f32[32,128], index: 0, kind: input, shape index: {}]
  %s1 = inlined_call_operand.vmem [shape: f32[128,128], index: 1, kind: input, shape index: {}]
  %s2 = inlined_call_operand.hbm [shape: f32[128,128], index: 2, kind: input, shape index: {}]
  %s3 = inlined_call_operand.hbm [shape: f32[128,128], index: 3, kind: input, shape index: {}]
  %s4 = inlined_call_operand.hbm [shape: f32[128,128], index: 4, kind: input, shape index: {}]
  %s5 = inlined_call_operand.vmem [shape: f32[1,128], index: 5, kind: input, shape index: {}]
  %s6 = inlined_call_operand.vmem [shape: f32[128,128], index: 6, kind: input, shape index: {}]
  %s7 = inlined_call_operand.vmem [shape: f32[32,128], index: 7, kind: input, shape index: {}]
  %s8 = inlined_call_operand.hbm [shape: f32[32,128], index: 8, kind: output, shape index: {}]
  %s9 = sld [smem:[#allocation0]]
  $region54: #{mha_forward.1} parent=0
    _
  %s11 = ssub.s32 1, %s9
  %s12 = scalar_select 0, %s11, %s9
  $region1: #{mha_forward.1} parent=0
    #allocation2 [shape = 'u8[65536]{0}', space=vmem, size = 0x10000, scoped, tag = 'input window, operand 2, single buffered']
    #allocation3 [shape = 's32[1]{0}', space=sflag, size = 0x4, scoped, tag = 'scoped memory for mha_forward.1']
    #allocation4 [shape = 's32[1]{0}', space=sflag, size = 0x4, scoped, tag = 'scoped memory for mha_forward.1']
    #allocation5 [shape = 'u8[65536]{0}', space=vmem, size = 0x10000, scoped, tag = 'input window, operand 3, single buffered']
    #allocation6 [shape = 's32[1]{0}', space=sflag, size = 0x4, scoped, tag = 'scoped memory for mha_forward.1']
    #allocation7 [shape = 'u8[65536]{0}', space=vmem, size = 0x10000, scoped, tag = 'input window, operand 4, single buffered']
    #allocation8 [shape = 'u8[16384]{0}', space=vmem, size = 0x4000, scoped, tag = 'output window, operand 0, single buffered']
    %13 = vsyncpa [#allocation3], 0
    %14 = vsyncpa [#allocation6], 0
    %15 = vsyncpa [#allocation4], 0
    // Predicated region
    $region2: #{mha_forward.1} parent=1 // pred_check
      _
    $region3: #{mha_forward.1} parent=1 // pred_check_branch
      %17 = sbr.rel (0) target = $region5
    $region4: #{mha_forward.1} parent=1 // pred_region
      _
    $region5: #{mha_forward.1} parent=1 // pred_fallthru
      _
    // Predicated region
    $region6: #{mha_forward.1} parent=1 // pred_check
      _
    $region7: #{mha_forward.1} parent=1 // pred_check_branch
      %19 = sbr.rel (0) target = $region9
    $region8: #{mha_forward.1} parent=1 // pred_region
      _
    $region9: #{mha_forward.1} parent=1 // pred_fallthru
      _
    // Predicated region
    $region10: #{mha_forward.1} parent=1 // pred_check
      _
    $region11: #{mha_forward.1} parent=1 // pred_check_branch
      %21 = sbr.rel (0) target = $region13
    $region12: #{mha_forward.1} parent=1 // pred_region
      %s23 = ssub.s32 2048, 2048
      %24 = vsyncadd [#allocation3], %s23
      %s25 = sshll.u32 [#allocation2], 4
      %s26 = int_to_ptr.vmem [resolvable:$true] %s25
      %31 = dma.hbm_to_vmem [thread:$0]  %s2, 2048, %s26, [#allocation3], 128, 128, 8
    $region13: #{mha_forward.1} parent=1 // pred_fallthru
      _
    // Predicated region
    $region14: #{mha_forward.1} parent=1 // pred_check
      _
    $region15: #{mha_forward.1} parent=1 // pred_check_branch
      %33 = sbr.rel (0) target = $region17
    $region16: #{mha_forward.1} parent=1 // pred_region
      %s35 = ssub.s32 2048, 2048
      %36 = vsyncadd [#allocation6], %s35
      %s37 = sshll.u32 [#allocation5], 4
      %s38 = int_to_ptr.vmem [resolvable:$true] %s37
      %43 = dma.hbm_to_vmem [thread:$0]  %s3, 2048, %s38, [#allocation6], 128, 128, 8
    $region17: #{mha_forward.1} parent=1 // pred_fallthru
      _
    // Predicated region
    $region18: #{mha_forward.1} parent=1 // pred_check
      _
    $region19: #{mha_forward.1} parent=1 // pred_check_branch
      %45 = sbr.rel (0) target = $region21
    $region20: #{mha_forward.1} parent=1 // pred_region
      %s47 = ssub.s32 2048, 2048
      %48 = vsyncadd [#allocation6], %s47
      %s49 = sshll.u32 [#allocation7], 4
      %s50 = int_to_ptr.vmem [resolvable:$true] %s49
      %55 = dma.hbm_to_vmem [thread:$0]  %s4, 2048, %s50, [#allocation6], 128, 128, 8
    $region21: #{mha_forward.1} parent=1 // pred_fallthru
      _
    // Predicated region
    $region22: #{mha_forward.1} parent=1 // pred_check
      _
    $region23: #{mha_forward.1} parent=1 // pred_check_branch
      %57 = sbr.rel (0) target = $region25
    $region24: #{mha_forward.1} parent=1 // pred_region
      _
    $region25: #{mha_forward.1} parent=1 // pred_fallthru
      _
    // Predicated region
    $region26: #{mha_forward.1} parent=1 // pred_check
      _
    $region27: #{mha_forward.1} parent=1 // pred_check_branch
      %59 = sbr.rel (0) target = $region29
    $region28: #{mha_forward.1} parent=1 // pred_region
      _
    $region29: #{mha_forward.1} parent=1 // pred_fallthru
      _
    // Predicated region
    $region30: #{mha_forward.1} parent=1 // pred_check
      _
    $region31: #{mha_forward.1} parent=1 // pred_check_branch
      %61 = sbr.rel (0) target = $region33
    $region32: #{mha_forward.1} parent=1 // pred_region
      _
    $region33: #{mha_forward.1} parent=1 // pred_fallthru
      _
    // Predicated region
    $region34: #{mha_forward.1} parent=1 // pred_check
      _
    $region35: #{mha_forward.1} parent=1 // pred_check_branch
      %63 = sbr.rel (0) target = $region37
    $region36: #{mha_forward.1} parent=1 // pred_region
      %64 = dma.done [#allocation3], 2048
    $region37: #{mha_forward.1} parent=1 // pred_fallthru
      _
    // Predicated region
    $region38: #{mha_forward.1} parent=1 // pred_check
      _
    $region39: #{mha_forward.1} parent=1 // pred_check_branch
      %66 = sbr.rel (0) target = $region41
    $region40: #{mha_forward.1} parent=1 // pred_region
      %67 = dma.done [#allocation6], 2048
    $region41: #{mha_forward.1} parent=1 // pred_fallthru
      _
    // Predicated region
    $region42: #{mha_forward.1} parent=1 // pred_check
      _
    $region43: #{mha_forward.1} parent=1 // pred_check_branch
      %69 = sbr.rel (0) target = $region45
    $region44: #{mha_forward.1} parent=1 // pred_region
      %70 = dma.done [#allocation6], 2048
    $region45: #{mha_forward.1} parent=1 // pred_fallthru
      _
    %v71 = vld [vmem:[%s0] sm:$0xff]
    %v72 = vld [vmem:[%s0 + $0x8] sm:$0xff]
    %v73 = vld [vmem:[%s0 + $0x10] sm:$0xff]
    %v74 = vld [vmem:[%s0 + $0x18] sm:$0xff]
    %v75 = vld [vmem:[%s1] sm:$0xff]
    %v76 = vld [vmem:[%s1 + $0x8] sm:$0xff]
    %v77 = vld [vmem:[%s1 + $0x10] sm:$0xff]
    %v78 = vld [vmem:[%s1 + $0x18] sm:$0xff]
    %v79 = vld [vmem:[%s1 + $0x20] sm:$0xff]
    %v80 = vld [vmem:[%s1 + $0x28] sm:$0xff]
    %v81 = vld [vmem:[%s1 + $0x30] sm:$0xff]
    %v82 = vld [vmem:[%s1 + $0x38] sm:$0xff]
    %v83 = vld [vmem:[%s1 + $0x40] sm:$0xff]
    %v84 = vld [vmem:[%s1 + $0x48] sm:$0xff]
    %v85 = vld [vmem:[%s1 + $0x50] sm:$0xff]
    %v86 = vld [vmem:[%s1 + $0x58] sm:$0xff]
    %v87 = vld [vmem:[%s1 + $0x60] sm:$0xff]
    %v88 = vld [vmem:[%s1 + $0x68] sm:$0xff]
    %v89 = vld [vmem:[%s1 + $0x70] sm:$0xff]
    %v90 = vld [vmem:[%s1 + $0x78] sm:$0xff]
    %91 = vmatprep.subr.mxu0 0.0
    %92 = vmatpush1.msra.mxu0 %v90
    %93 = vmatprep.subr.mxu0 0.0
    %94 = vmatpush1.msra.mxu0 %v89
    %95 = vmatprep.subr.mxu0 0.0
    %96 = vmatpush1.msra.mxu0 %v88
    %97 = vmatprep.subr.mxu0 0.0
    %98 = vmatpush1.msra.mxu0 %v87
    %99 = vmatprep.subr.mxu0 0.0
    %100 = vmatpush1.msra.mxu0 %v86
    %101 = vmatprep.subr.mxu0 0.0
    %102 = vmatpush1.msra.mxu0 %v85
    %103 = vmatprep.subr.mxu0 0.0
    %104 = vmatpush1.msra.mxu0 %v84
    %105 = vmatprep.subr.mxu0 0.0
    %106 = vmatpush1.msra.mxu0 %v83
    %107 = vmatprep.subr.mxu0 0.0
    %108 = vmatpush1.msra.mxu0 %v82
    %109 = vmatprep.subr.mxu0 0.0
    %110 = vmatpush1.msra.mxu0 %v81
    %111 = vmatprep.subr.mxu0 0.0
    %112 = vmatpush1.msra.mxu0 %v80
    %113 = vmatprep.subr.mxu0 0.0
    %114 = vmatpush1.msra.mxu0 %v79
    %115 = vmatprep.subr.mxu0 0.0
    %116 = vmatpush1.msra.mxu0 %v78
    %117 = vmatprep.subr.mxu0 0.0
    %118 = vmatpush1.msra.mxu0 %v77
    %119 = vmatprep.subr.mxu0 0.0
    %120 = vmatpush1.msra.mxu0 %v76
    %121 = vmatprep.subr.mxu0 0.0
    %122 = vmatpush1.msra.mxu0 %v75
    %123 = vmatprep.subr.mxu0 0.0
    %124 = vmatpush2.msra.mxu0 0.0
    %125 = vmatprep.subr.mxu0 0.0
    %126 = vmatpush2.msra.mxu0 0.0
    %127 = vmatprep.subr.mxu0 0.0
    %128 = vmatpush2.msra.mxu0 0.0
    %129 = vmatprep.subr.mxu0 0.0
    %130 = vmatpush2.msra.mxu0 0.0
    %131 = vmatprep.subr.mxu0 0.0
    %132 = vmatpush2.msra.mxu0 0.0
    %133 = vmatprep.subr.mxu0 0.0
    %134 = vmatpush2.msra.mxu0 0.0
    %135 = vmatprep.subr.mxu0 0.0
    %136 = vmatpush2.msra.mxu0 0.0
    %137 = vmatprep.subr.mxu0 0.0
    %138 = vmatpush2.msra.mxu0 0.0
    %139 = vmatprep.subr.mxu0 0.0
    %140 = vmatpush2.msra.mxu0 0.0
    %141 = vmatprep.subr.mxu0 0.0
    %142 = vmatpush2.msra.mxu0 0.0
    %143 = vmatprep.subr.mxu0 0.0
    %144 = vmatpush2.msra.mxu0 0.0
    %145 = vmatprep.subr.mxu0 0.0
    %146 = vmatpush2.msra.mxu0 0.0
    %147 = vmatprep.subr.mxu0 0.0
    %148 = vmatpush2.msra.mxu0 0.0
    %149 = vmatprep.subr.mxu0 0.0
    %150 = vmatpush2.msra.mxu0 0.0
    %151 = vmatprep.subr.mxu0 0.0
    %152 = vmatpush2.msra.mxu0 0.0
    %153 = vmatprep.subr.mxu0 0.0
    %154 = vmatpush2.msra.mxu0 0.0
    %155 = vmatprep.mubr.f32.mxu0 0.0
    %156 = vmatmul.mubr.f32.gmra.mxu0 %v71
    %v157 = vpop.f32.mrf.mxu0
    %v158 = vadd.f32 0.0, %v157
    %v159 = vpop.f32.mrf.mxu0
    %160 = vmatprep.mubr.f32.mxu0 0.0
    %161 = vmatmul.mubr.f32.gmra.mxu0 %v72
    %v162 = vpop.f32.mrf.mxu0
    %v163 = vadd.f32 0.0, %v162
    %v164 = vpop.f32.mrf.mxu0
    %165 = vmatprep.mubr.f32.mxu0 0.0
    %166 = vmatmul.mubr.f32.gmra.mxu0 %v73
    %v167 = vpop.f32.mrf.mxu0
    %v168 = vadd.f32 0.0, %v167
    %v169 = vpop.f32.mrf.mxu0
    %170 = vmatprep.mubr.f32.mxu0 0.0
    %171 = vmatmul.mubr.f32.gmra.mxu0 %v74
    %v172 = vpop.f32.mrf.mxu0
    %v173 = vadd.f32 0.0, %v172
    %v174 = vpop.f32.mrf.mxu0
    %175 = vdwg.mxu0
    %v176 = vld [vmem:[#allocation2] sm:$0xff]
    %v177 = vld [vmem:[#allocation2 + $0x8] sm:$0xff]
    %v178 = vld [vmem:[#allocation2 + $0x10] sm:$0xff]
    %v179 = vld [vmem:[#allocation2 + $0x18] sm:$0xff]
    %v180 = vld [vmem:[#allocation2 + $0x20] sm:$0xff]
    %v181 = vld [vmem:[#allocation2 + $0x28] sm:$0xff]
    %v182 = vld [vmem:[#allocation2 + $0x30] sm:$0xff]
    %v183 = vld [vmem:[#allocation2 + $0x38] sm:$0xff]
    %v184 = vld [vmem:[#allocation2 + $0x40] sm:$0xff]
    %v185 = vld [vmem:[#allocation2 + $0x48] sm:$0xff]
    %v186 = vld [vmem:[#allocation2 + $0x50] sm:$0xff]
    %v187 = vld [vmem:[#allocation2 + $0x58] sm:$0xff]
    %v188 = vld [vmem:[#allocation2 + $0x60] sm:$0xff]
    %v189 = vld [vmem:[#allocation2 + $0x68] sm:$0xff]
    %v190 = vld [vmem:[#allocation2 + $0x70] sm:$0xff]
    %v191 = vld [vmem:[#allocation2 + $0x78] sm:$0xff]
    %192 = vmatprep.subr.mxu0 0.0
    %193 = vmatpush1.msra.mxu0 %v191
    %194 = vmatprep.subr.mxu0 0.0
    %195 = vmatpush1.msra.mxu0 %v190
    %196 = vmatprep.subr.mxu0 0.0
    %197 = vmatpush1.msra.mxu0 %v189
    %198 = vmatprep.subr.mxu0 0.0
    %199 = vmatpush1.msra.mxu0 %v188
    %200 = vmatprep.subr.mxu0 0.0
    %201 = vmatpush1.msra.mxu0 %v187
    %202 = vmatprep.subr.mxu0 0.0
    %203 = vmatpush1.msra.mxu0 %v186
    %204 = vmatprep.subr.mxu0 0.0
    %205 = vmatpush1.msra.mxu0 %v185
    %206 = vmatprep.subr.mxu0 0.0
    %207 = vmatpush1.msra.mxu0 %v184
    %208 = vmatprep.subr.mxu0 0.0
    %209 = vmatpush1.msra.mxu0 %v183
    %210 = vmatprep.subr.mxu0 0.0
    %211 = vmatpush1.msra.mxu0 %v182
    %212 = vmatprep.subr.mxu0 0.0
    %213 = vmatpush1.msra.mxu0 %v181
    %214 = vmatprep.subr.mxu0 0.0
    %215 = vmatpush1.msra.mxu0 %v180
    %216 = vmatprep.subr.mxu0 0.0
    %217 = vmatpush1.msra.mxu0 %v179
    %218 = vmatprep.subr.mxu0 0.0
    %219 = vmatpush1.msra.mxu0 %v178
    %220 = vmatprep.subr.mxu0 0.0
    %221 = vmatpush1.msra.mxu0 %v177
    %222 = vmatprep.subr.mxu0 0.0
    %223 = vmatpush1.msra.mxu0 %v176
    %224 = vmatprep.subr.mxu0 0.0
    %225 = vmatpush2.msra.mxu0 0.0
    %226 = vmatprep.subr.mxu0 0.0
    %227 = vmatpush2.msra.mxu0 0.0
    %228 = vmatprep.subr.mxu0 0.0
    %229 = vmatpush2.msra.mxu0 0.0
    %230 = vmatprep.subr.mxu0 0.0
    %231 = vmatpush2.msra.mxu0 0.0
    %232 = vmatprep.subr.mxu0 0.0
    %233 = vmatpush2.msra.mxu0 0.0
    %234 = vmatprep.subr.mxu0 0.0
    %235 = vmatpush2.msra.mxu0 0.0
    %236 = vmatprep.subr.mxu0 0.0
    %237 = vmatpush2.msra.mxu0 0.0
    %238 = vmatprep.subr.mxu0 0.0
    %239 = vmatpush2.msra.mxu0 0.0
    %240 = vmatprep.subr.mxu0 0.0
    %241 = vmatpush2.msra.mxu0 0.0
    %242 = vmatprep.subr.mxu0 0.0
    %243 = vmatpush2.msra.mxu0 0.0
    %244 = vmatprep.subr.mxu0 0.0
    %245 = vmatpush2.msra.mxu0 0.0
    %246 = vmatprep.subr.mxu0 0.0
    %247 = vmatpush2.msra.mxu0 0.0
    %248 = vmatprep.subr.mxu0 0.0
    %249 = vmatpush2.msra.mxu0 0.0
    %250 = vmatprep.subr.mxu0 0.0
    %251 = vmatpush2.msra.mxu0 0.0
    %252 = vmatprep.subr.mxu0 0.0
    %253 = vmatpush2.msra.mxu0 0.0
    %254 = vmatprep.subr.mxu0 0.0
    %255 = vmatpush2.msra.mxu0 0.0
    %256 = vmatprep.mubr.f32.mxu0 0.0
    %257 = vmatmul.mubr.f32.gmra.mxu0 %v71
    %v258 = vpop.f32.mrf.mxu0
    %v259 = vadd.f32 0.0, %v258
    %v260 = vpop.f32.mrf.mxu0
    %261 = vmatprep.mubr.f32.mxu0 0.0
    %262 = vmatmul.mubr.f32.gmra.mxu0 %v72
    %v263 = vpop.f32.mrf.mxu0
    %v264 = vadd.f32 0.0, %v263
    %v265 = vpop.f32.mrf.mxu0
    %266 = vmatprep.mubr.f32.mxu0 0.0
    %267 = vmatmul.mubr.f32.gmra.mxu0 %v73
    %v268 = vpop.f32.mrf.mxu0
    %v269 = vadd.f32 0.0, %v268
    %v270 = vpop.f32.mrf.mxu0
    %271 = vmatprep.mubr.f32.mxu0 0.0
    %272 = vmatmul.mubr.f32.gmra.mxu0 %v74
    %v273 = vpop.f32.mrf.mxu0
    %v274 = vadd.f32 0.0, %v273
    %v275 = vpop.f32.mrf.mxu0
    %276 = vdwg.mxu0
    %v277 = vld [vmem:[#allocation5] sm:$0xff]
    %v278 = vld [vmem:[#allocation5 + $0x8] sm:$0xff]
    %v279 = vld [vmem:[#allocation5 + $0x10] sm:$0xff]
    %v280 = vld [vmem:[#allocation5 + $0x18] sm:$0xff]
    %v281 = vld [vmem:[#allocation5 + $0x20] sm:$0xff]
    %v282 = vld [vmem:[#allocation5 + $0x28] sm:$0xff]
    %v283 = vld [vmem:[#allocation5 + $0x30] sm:$0xff]
    %v284 = vld [vmem:[#allocation5 + $0x38] sm:$0xff]
    %v285 = vld [vmem:[#allocation5 + $0x40] sm:$0xff]
    %v286 = vld [vmem:[#allocation5 + $0x48] sm:$0xff]
    %v287 = vld [vmem:[#allocation5 + $0x50] sm:$0xff]
    %v288 = vld [vmem:[#allocation5 + $0x58] sm:$0xff]
    %v289 = vld [vmem:[#allocation5 + $0x60] sm:$0xff]
    %v290 = vld [vmem:[#allocation5 + $0x68] sm:$0xff]
    %v291 = vld [vmem:[#allocation5 + $0x70] sm:$0xff]
    %v292 = vld [vmem:[#allocation5 + $0x78] sm:$0xff]
    %293 = vmatprep.subr.mxu0 0.0
    %294 = vmatpush1.msra.mxu0 %v292
    %295 = vmatprep.subr.mxu0 0.0
    %296 = vmatpush1.msra.mxu0 %v291
    %297 = vmatprep.subr.mxu0 0.0
    %298 = vmatpush1.msra.mxu0 %v290
    %299 = vmatprep.subr.mxu0 0.0
    %300 = vmatpush1.msra.mxu0 %v289
    %301 = vmatprep.subr.mxu0 0.0
    %302 = vmatpush1.msra.mxu0 %v288
    %303 = vmatprep.subr.mxu0 0.0
    %304 = vmatpush1.msra.mxu0 %v287
    %305 = vmatprep.subr.mxu0 0.0
    %306 = vmatpush1.msra.mxu0 %v286
    %307 = vmatprep.subr.mxu0 0.0
    %308 = vmatpush1.msra.mxu0 %v285
    %309 = vmatprep.subr.mxu0 0.0
    %310 = vmatpush1.msra.mxu0 %v284
    %311 = vmatprep.subr.mxu0 0.0
    %312 = vmatpush1.msra.mxu0 %v283
    %313 = vmatprep.subr.mxu0 0.0
    %314 = vmatpush1.msra.mxu0 %v282
    %315 = vmatprep.subr.mxu0 0.0
    %316 = vmatpush1.msra.mxu0 %v281
    %317 = vmatprep.subr.mxu0 0.0
    %318 = vmatpush1.msra.mxu0 %v280
    %319 = vmatprep.subr.mxu0 0.0
    %320 = vmatpush1.msra.mxu0 %v279
    %321 = vmatprep.subr.mxu0 0.0
    %322 = vmatpush1.msra.mxu0 %v278
    %323 = vmatprep.subr.mxu0 0.0
    %324 = vmatpush1.msra.mxu0 %v277
    %325 = vmatprep.subr.mxu0 0.0
    %326 = vmatpush2.msra.mxu0 0.0
    %327 = vmatprep.subr.mxu0 0.0
    %328 = vmatpush2.msra.mxu0 0.0
    %329 = vmatprep.subr.mxu0 0.0
    %330 = vmatpush2.msra.mxu0 0.0
    %331 = vmatprep.subr.mxu0 0.0
    %332 = vmatpush2.msra.mxu0 0.0
    %333 = vmatprep.subr.mxu0 0.0
    %334 = vmatpush2.msra.mxu0 0.0
    %335 = vmatprep.subr.mxu0 0.0
    %336 = vmatpush2.msra.mxu0 0.0
    %337 = vmatprep.subr.mxu0 0.0
    %338 = vmatpush2.msra.mxu0 0.0
    %339 = vmatprep.subr.mxu0 0.0
    %340 = vmatpush2.msra.mxu0 0.0
    %341 = vmatprep.subr.mxu0 0.0
    %342 = vmatpush2.msra.mxu0 0.0
    %343 = vmatprep.subr.mxu0 0.0
    %344 = vmatpush2.msra.mxu0 0.0
    %345 = vmatprep.subr.mxu0 0.0
    %346 = vmatpush2.msra.mxu0 0.0
    %347 = vmatprep.subr.mxu0 0.0
    %348 = vmatpush2.msra.mxu0 0.0
    %349 = vmatprep.subr.mxu0 0.0
    %350 = vmatpush2.msra.mxu0 0.0
    %351 = vmatprep.subr.mxu0 0.0
    %352 = vmatpush2.msra.mxu0 0.0
    %353 = vmatprep.subr.mxu0 0.0
    %354 = vmatpush2.msra.mxu0 0.0
    %355 = vmatprep.subr.mxu0 0.0
    %356 = vmatpush2.msra.mxu0 0.0
    %357 = vmatprep.mubr.f32.mxu0 0.0
    %358 = vmatmul.mubr.f32.gmra.mxu0 %v71
    %v359 = vpop.f32.mrf.mxu0
    %v360 = vadd.f32 0.0, %v359
    %v361 = vpop.f32.mrf.mxu0
    %362 = vmatprep.mubr.f32.mxu0 0.0
    %363 = vmatmul.mubr.f32.gmra.mxu0 %v72
    %v364 = vpop.f32.mrf.mxu0
    %v365 = vadd.f32 0.0, %v364
    %v366 = vpop.f32.mrf.mxu0
    %367 = vmatprep.mubr.f32.mxu0 0.0
    %368 = vmatmul.mubr.f32.gmra.mxu0 %v73
    %v369 = vpop.f32.mrf.mxu0
    %v370 = vadd.f32 0.0, %v369
    %v371 = vpop.f32.mrf.mxu0
    %372 = vmatprep.mubr.f32.mxu0 0.0
    %373 = vmatmul.mubr.f32.gmra.mxu0 %v74
    %v374 = vpop.f32.mrf.mxu0
    %v375 = vadd.f32 0.0, %v374
    %v376 = vpop.f32.mrf.mxu0
    %377 = vdwg.mxu0
    %v378 = vld [vmem:[%s6] sm:$0xff]
    %v379 = vld [vmem:[%s6 + $0x8] sm:$0xff]
    %v380 = vld [vmem:[%s6 + $0x10] sm:$0xff]
    %v381 = vld [vmem:[%s6 + $0x18] sm:$0xff]
    %v382 = vld [vmem:[%s6 + $0x20] sm:$0xff]
    %v383 = vld [vmem:[%s6 + $0x28] sm:$0xff]
    %v384 = vld [vmem:[%s6 + $0x30] sm:$0xff]
    %v385 = vld [vmem:[%s6 + $0x38] sm:$0xff]
    %v386 = vld [vmem:[%s6 + $0x40] sm:$0xff]
    %v387 = vld [vmem:[%s6 + $0x48] sm:$0xff]
    %v388 = vld [vmem:[%s6 + $0x50] sm:$0xff]
    %v389 = vld [vmem:[%s6 + $0x58] sm:$0xff]
    %v390 = vld [vmem:[%s6 + $0x60] sm:$0xff]
    %v391 = vld [vmem:[%s6 + $0x68] sm:$0xff]
    %v392 = vld [vmem:[%s6 + $0x70] sm:$0xff]
    %v393 = vld [vmem:[%s6 + $0x78] sm:$0xff]
    %v394 = vmul.f32 %v259, %v378
    %v395 = vmul.f32 %v264, %v379
    %v396 = vmul.f32 %v269, %v380
    %v397 = vmul.f32 %v274, %v381
    %v398 = vmul.f32 %v259, %v382
    %v399 = vmul.f32 %v264, %v383
    %v400 = vmul.f32 %v269, %v384
    %v401 = vmul.f32 %v274, %v385
    %v402 = vmul.f32 %v259, %v386
    %v403 = vmul.f32 %v264, %v387
    %v404 = vmul.f32 %v269, %v388
    %v405 = vmul.f32 %v274, %v389
    %v406 = vmul.f32 %v259, %v390
    %v407 = vmul.f32 %v264, %v391
    %v408 = vmul.f32 %v269, %v392
    %v409 = vmul.f32 %v274, %v393
    %v410 = vmul.f32 %v360, %v378
    %v411 = vmul.f32 %v365, %v379
    %v412 = vmul.f32 %v370, %v380
    %v413 = vmul.f32 %v375, %v381
    %v414 = vmul.f32 %v360, %v382
    %v415 = vmul.f32 %v365, %v383
    %v416 = vmul.f32 %v370, %v384
    %v417 = vmul.f32 %v375, %v385
    %v418 = vmul.f32 %v360, %v386
    %v419 = vmul.f32 %v365, %v387
    %v420 = vmul.f32 %v370, %v388
    %v421 = vmul.f32 %v375, %v389
    %v422 = vmul.f32 %v360, %v390
    %v423 = vmul.f32 %v365, %v391
    %v424 = vmul.f32 %v370, %v392
    %v425 = vmul.f32 %v375, %v393
    %426 = vmatprep.subr.mxu0 0.0
    %427 = vmatpush1.xpose.msra.mxu0 %v409
    %428 = vmatprep.subr.mxu0 0.0
    %429 = vmatpush1.xpose.msra.mxu0 %v408
    %430 = vmatprep.subr.mxu0 0.0
    %431 = vmatpush1.xpose.msra.mxu0 %v407
    %432 = vmatprep.subr.mxu0 0.0
    %433 = vmatpush1.xpose.msra.mxu0 %v406
    %434 = vmatprep.subr.mxu0 0.0
    %435 = vmatpush1.xpose.msra.mxu0 %v405
    %436 = vmatprep.subr.mxu0 0.0
    %437 = vmatpush1.xpose.msra.mxu0 %v404
    %438 = vmatprep.subr.mxu0 0.0
    %439 = vmatpush1.xpose.msra.mxu0 %v403
    %440 = vmatprep.subr.mxu0 0.0
    %441 = vmatpush1.xpose.msra.mxu0 %v402
    %442 = vmatprep.subr.mxu0 0.0
    %443 = vmatpush1.xpose.msra.mxu0 %v401
    %444 = vmatprep.subr.mxu0 0.0
    %445 = vmatpush1.xpose.msra.mxu0 %v400
    %446 = vmatprep.subr.mxu0 0.0
    %447 = vmatpush1.xpose.msra.mxu0 %v399
    %448 = vmatprep.subr.mxu0 0.0
    %449 = vmatpush1.xpose.msra.mxu0 %v398
    %450 = vmatprep.subr.mxu0 0.0
    %451 = vmatpush1.xpose.msra.mxu0 %v397
    %452 = vmatprep.subr.mxu0 0.0
    %453 = vmatpush1.xpose.msra.mxu0 %v396
    %454 = vmatprep.subr.mxu0 0.0
    %455 = vmatpush1.xpose.msra.mxu0 %v395
    %456 = vmatprep.subr.mxu0 0.0
    %457 = vmatpush1.xpose.msra.mxu0 %v394
    %458 = vmatprep.subr.mxu0 0.0
    %459 = vmatpush2.xpose.msra.mxu0 0.0
    %460 = vmatprep.subr.mxu0 0.0
    %461 = vmatpush2.xpose.msra.mxu0 0.0
    %462 = vmatprep.subr.mxu0 0.0
    %463 = vmatpush2.xpose.msra.mxu0 0.0
    %464 = vmatprep.subr.mxu0 0.0
    %465 = vmatpush2.xpose.msra.mxu0 0.0
    %466 = vmatprep.subr.mxu0 0.0
    %467 = vmatpush2.xpose.msra.mxu0 0.0
    %468 = vmatprep.subr.mxu0 0.0
    %469 = vmatpush2.xpose.msra.mxu0 0.0
    %470 = vmatprep.subr.mxu0 0.0
    %471 = vmatpush2.xpose.msra.mxu0 0.0
    %472 = vmatprep.subr.mxu0 0.0
    %473 = vmatpush2.xpose.msra.mxu0 0.0
    %474 = vmatprep.subr.mxu0 0.0
    %475 = vmatpush2.xpose.msra.mxu0 0.0
    %476 = vmatprep.subr.mxu0 0.0
    %477 = vmatpush2.xpose.msra.mxu0 0.0
    %478 = vmatprep.subr.mxu0 0.0
    %479 = vmatpush2.xpose.msra.mxu0 0.0
    %480 = vmatprep.subr.mxu0 0.0
    %481 = vmatpush2.xpose.msra.mxu0 0.0
    %482 = vmatprep.subr.mxu0 0.0
    %483 = vmatpush2.xpose.msra.mxu0 0.0
    %484 = vmatprep.subr.mxu0 0.0
    %485 = vmatpush2.xpose.msra.mxu0 0.0
    %486 = vmatprep.subr.mxu0 0.0
    %487 = vmatpush2.xpose.msra.mxu0 0.0
    %488 = vmatprep.subr.mxu0 0.0
    %489 = vmatpush2.xpose.msra.mxu0 0.0
    %490 = vmatprep.mubr.f32.mxu0 0.0
    %491 = vmatmul.mubr.f32.gmra.mxu0 %v158
    %v492 = vpop.f32.mrf.mxu0
    %v493 = vadd.f32 0.0, %v492
    %v494 = vpop.f32.mrf.mxu0
    %495 = vmatprep.mubr.f32.mxu0 0.0
    %496 = vmatmul.mubr.f32.gmra.mxu0 %v163
    %v497 = vpop.f32.mrf.mxu0
    %v498 = vadd.f32 0.0, %v497
    %v499 = vpop.f32.mrf.mxu0
    %500 = vmatprep.mubr.f32.mxu0 0.0
    %501 = vmatmul.mubr.f32.gmra.mxu0 %v168
    %v502 = vpop.f32.mrf.mxu0
    %v503 = vadd.f32 0.0, %v502
    %v504 = vpop.f32.mrf.mxu0
    %505 = vmatprep.mubr.f32.mxu0 0.0
    %506 = vmatmul.mubr.f32.gmra.mxu0 %v173
    %v507 = vpop.f32.mrf.mxu0
    %v508 = vadd.f32 0.0, %v507
    %v509 = vpop.f32.mrf.mxu0
    %510 = vdwg.mxu0
    %v511 = vmul.f32 %v493, 0.17677669
    %v512 = vmul.f32 %v498, 0.17677669
    %v513 = vmul.f32 %v503, 0.17677669
    %v514 = vmul.f32 %v508, 0.17677669
    %v515 = vld [vmem:[%s7] sm:$0xff]
    %v516 = vld [vmem:[%s7 + $0x8] sm:$0xff]
    %v517 = vld [vmem:[%s7 + $0x10] sm:$0xff]
    %v518 = vld [vmem:[%s7 + $0x18] sm:$0xff]
    %v519 = vadd.f32 %v511, %v515
    %v520 = vadd.f32 %v512, %v516
    %v521 = vadd.f32 %v513, %v517
    %v522 = vadd.f32 %v514, %v518
    %523 = vmax.xlane.f32.xlu0 %v519
    %v524 = vpop.xlane.xlu0 %523
    %525 = vmax.xlane.f32.xlu0 %v520
    %v526 = vpop.xlane.xlu0 %525
    %527 = vmax.xlane.f32.xlu0 %v521
    %v528 = vpop.xlane.xlu0 %527
    %529 = vmax.xlane.f32.xlu0 %v522
    %v530 = vpop.xlane.xlu0 %529
    %v531 = vsub.f32 %v519, %v524
    %v532 = vsub.f32 %v520, %v526
    %v533 = vsub.f32 %v521, %v528
    %v534 = vsub.f32 %v522, %v530
    %v535 = vmul.f32 %v531, 1.442695
    %v536 = vpow.pop %v535
    %v537 = vmul.f32 %v532, 1.442695
    %v538 = vpow.pop %v537
    %v539 = vmul.f32 %v533, 1.442695
    %v540 = vpow.pop %v539
    %v541 = vmul.f32 %v534, 1.442695
    %v542 = vpow.pop %v541
    %543 = vmatprep.subr.mxu0 0.0
    %544 = vmatpush1.msra.mxu0 %v425
    %545 = vmatprep.subr.mxu0 0.0
    %546 = vmatpush1.msra.mxu0 %v424
    %547 = vmatprep.subr.mxu0 0.0
    %548 = vmatpush1.msra.mxu0 %v423
    %549 = vmatprep.subr.mxu0 0.0
    %550 = vmatpush1.msra.mxu0 %v422
    %551 = vmatprep.subr.mxu0 0.0
    %552 = vmatpush1.msra.mxu0 %v421
    %553 = vmatprep.subr.mxu0 0.0
    %554 = vmatpush1.msra.mxu0 %v420
    %555 = vmatprep.subr.mxu0 0.0
    %556 = vmatpush1.msra.mxu0 %v419
    %557 = vmatprep.subr.mxu0 0.0
    %558 = vmatpush1.msra.mxu0 %v418
    %559 = vmatprep.subr.mxu0 0.0
    %560 = vmatpush1.msra.mxu0 %v417
    %561 = vmatprep.subr.mxu0 0.0
    %562 = vmatpush1.msra.mxu0 %v416
    %563 = vmatprep.subr.mxu0 0.0
    %564 = vmatpush1.msra.mxu0 %v415
    %565 = vmatprep.subr.mxu0 0.0
    %566 = vmatpush1.msra.mxu0 %v414
    %567 = vmatprep.subr.mxu0 0.0
    %568 = vmatpush1.msra.mxu0 %v413
    %569 = vmatprep.subr.mxu0 0.0
    %570 = vmatpush1.msra.mxu0 %v412
    %571 = vmatprep.subr.mxu0 0.0
    %572 = vmatpush1.msra.mxu0 %v411
    %573 = vmatprep.subr.mxu0 0.0
    %574 = vmatpush1.msra.mxu0 %v410
    %575 = vmatprep.subr.mxu0 0.0
    %576 = vmatpush2.msra.mxu0 0.0
    %577 = vmatprep.subr.mxu0 0.0
    %578 = vmatpush2.msra.mxu0 0.0
    %579 = vmatprep.subr.mxu0 0.0
    %580 = vmatpush2.msra.mxu0 0.0
    %581 = vmatprep.subr.mxu0 0.0
    %582 = vmatpush2.msra.mxu0 0.0
    %583 = vmatprep.subr.mxu0 0.0
    %584 = vmatpush2.msra.mxu0 0.0
    %585 = vmatprep.subr.mxu0 0.0
    %586 = vmatpush2.msra.mxu0 0.0
    %587 = vmatprep.subr.mxu0 0.0
    %588 = vmatpush2.msra.mxu0 0.0
    %589 = vmatprep.subr.mxu0 0.0
    %590 = vmatpush2.msra.mxu0 0.0
    %591 = vmatprep.subr.mxu0 0.0
    %592 = vmatpush2.msra.mxu0 0.0
    %593 = vmatprep.subr.mxu0 0.0
    %594 = vmatpush2.msra.mxu0 0.0
    %595 = vmatprep.subr.mxu0 0.0
    %596 = vmatpush2.msra.mxu0 0.0
    %597 = vmatprep.subr.mxu0 0.0
    %598 = vmatpush2.msra.mxu0 0.0
    %599 = vmatprep.subr.mxu0 0.0
    %600 = vmatpush2.msra.mxu0 0.0
    %601 = vmatprep.subr.mxu0 0.0
    %602 = vmatpush2.msra.mxu0 0.0
    %603 = vmatprep.subr.mxu0 0.0
    %604 = vmatpush2.msra.mxu0 0.0
    %605 = vmatprep.subr.mxu0 0.0
    %606 = vmatpush2.msra.mxu0 0.0
    %607 = vmatprep.mubr.f32.mxu0 0.0
    %608 = vmatmul.mubr.f32.gmra.mxu0 %v536
    %v609 = vpop.f32.mrf.mxu0
    %v610 = vadd.f32 0.0, %v609
    %v611 = vpop.f32.mrf.mxu0
    %612 = vmatprep.mubr.f32.mxu0 0.0
    %613 = vmatmul.mubr.f32.gmra.mxu0 %v538
    %v614 = vpop.f32.mrf.mxu0
    %v615 = vadd.f32 0.0, %v614
    %v616 = vpop.f32.mrf.mxu0
    %617 = vmatprep.mubr.f32.mxu0 0.0
    %618 = vmatmul.mubr.f32.gmra.mxu0 %v540
    %v619 = vpop.f32.mrf.mxu0
    %v620 = vadd.f32 0.0, %v619
    %v621 = vpop.f32.mrf.mxu0
    %622 = vmatprep.mubr.f32.mxu0 0.0
    %623 = vmatmul.mubr.f32.gmra.mxu0 %v542
    %v624 = vpop.f32.mrf.mxu0
    %v625 = vadd.f32 0.0, %v624
    %v626 = vpop.f32.mrf.mxu0
    %627 = vdwg.mxu0
    %628 = vmatprep.subr.mxu0 0.0
    %629 = vmatpush1.msra.mxu0 %v393
    %630 = vmatprep.subr.mxu0 0.0
    %631 = vmatpush1.msra.mxu0 %v392
    %632 = vmatprep.subr.mxu0 0.0
    %633 = vmatpush1.msra.mxu0 %v391
    %634 = vmatprep.subr.mxu0 0.0
    %635 = vmatpush1.msra.mxu0 %v390
    %636 = vmatprep.subr.mxu0 0.0
    %637 = vmatpush1.msra.mxu0 %v389
    %638 = vmatprep.subr.mxu0 0.0
    %639 = vmatpush1.msra.mxu0 %v388
    %640 = vmatprep.subr.mxu0 0.0
    %641 = vmatpush1.msra.mxu0 %v387
    %642 = vmatprep.subr.mxu0 0.0
    %643 = vmatpush1.msra.mxu0 %v386
    %644 = vmatprep.subr.mxu0 0.0
    %645 = vmatpush1.msra.mxu0 %v385
    %646 = vmatprep.subr.mxu0 0.0
    %647 = vmatpush1.msra.mxu0 %v384
    %648 = vmatprep.subr.mxu0 0.0
    %649 = vmatpush1.msra.mxu0 %v383
    %650 = vmatprep.subr.mxu0 0.0
    %651 = vmatpush1.msra.mxu0 %v382
    %652 = vmatprep.subr.mxu0 0.0
    %653 = vmatpush1.msra.mxu0 %v381
    %654 = vmatprep.subr.mxu0 0.0
    %655 = vmatpush1.msra.mxu0 %v380
    %656 = vmatprep.subr.mxu0 0.0
    %657 = vmatpush1.msra.mxu0 %v379
    %658 = vmatprep.subr.mxu0 0.0
    %659 = vmatpush1.msra.mxu0 %v378
    %660 = vmatprep.subr.mxu0 0.0
    %661 = vmatpush2.msra.mxu0 0.0
    %662 = vmatprep.subr.mxu0 0.0
    %663 = vmatpush2.msra.mxu0 0.0
    %664 = vmatprep.subr.mxu0 0.0
    %665 = vmatpush2.msra.mxu0 0.0
    %666 = vmatprep.subr.mxu0 0.0
    %667 = vmatpush2.msra.mxu0 0.0
    %668 = vmatprep.subr.mxu0 0.0
    %669 = vmatpush2.msra.mxu0 0.0
    %670 = vmatprep.subr.mxu0 0.0
    %671 = vmatpush2.msra.mxu0 0.0
    %672 = vmatprep.subr.mxu0 0.0
    %673 = vmatpush2.msra.mxu0 0.0
    %674 = vmatprep.subr.mxu0 0.0
    %675 = vmatpush2.msra.mxu0 0.0
    %676 = vmatprep.subr.mxu0 0.0
    %677 = vmatpush2.msra.mxu0 0.0
    %678 = vmatprep.subr.mxu0 0.0
    %679 = vmatpush2.msra.mxu0 0.0
    %680 = vmatprep.subr.mxu0 0.0
    %681 = vmatpush2.msra.mxu0 0.0
    %682 = vmatprep.subr.mxu0 0.0
    %683 = vmatpush2.msra.mxu0 0.0
    %684 = vmatprep.subr.mxu0 0.0
    %685 = vmatpush2.msra.mxu0 0.0
    %686 = vmatprep.subr.mxu0 0.0
    %687 = vmatpush2.msra.mxu0 0.0
    %688 = vmatprep.subr.mxu0 0.0
    %689 = vmatpush2.msra.mxu0 0.0
    %690 = vmatprep.subr.mxu0 0.0
    %691 = vmatpush2.msra.mxu0 0.0
    %692 = vmatprep.mubr.f32.mxu0 0.0
    %693 = vmatmul.mubr.f32.gmra.mxu0 %v536
    %v694 = vpop.f32.mrf.mxu0
    %v695 = vadd.f32 0.0, %v694
    %v696 = vpop.f32.mrf.mxu0
    %697 = vmatprep.mubr.f32.mxu0 0.0
    %698 = vmatmul.mubr.f32.gmra.mxu0 %v538
    %v699 = vpop.f32.mrf.mxu0
    %v700 = vadd.f32 0.0, %v699
    %v701 = vpop.f32.mrf.mxu0
    %702 = vmatprep.mubr.f32.mxu0 0.0
    %703 = vmatmul.mubr.f32.gmra.mxu0 %v540
    %v704 = vpop.f32.mrf.mxu0
    %v705 = vadd.f32 0.0, %v704
    %v706 = vpop.f32.mrf.mxu0
    %707 = vmatprep.mubr.f32.mxu0 0.0
    %708 = vmatmul.mubr.f32.gmra.mxu0 %v542
    %v709 = vpop.f32.mrf.mxu0
    %v710 = vadd.f32 0.0, %v709
    %v711 = vpop.f32.mrf.mxu0
    %712 = vdwg.mxu0
    %v713 = vrcp.pop %v695
    %v714 = vmul.f32 %v610, %v713
    %v715 = vrcp.pop %v700
    %v716 = vmul.f32 %v615, %v715
    %v717 = vrcp.pop %v705
    %v718 = vmul.f32 %v620, %v717
    %v719 = vrcp.pop %v710
    %v720 = vmul.f32 %v625, %v719
    %v721 = vld [vmem:[#allocation7] sm:$0xff]
    %v722 = vld [vmem:[#allocation7 + $0x8] sm:$0xff]
    %v723 = vld [vmem:[#allocation7 + $0x10] sm:$0xff]
    %v724 = vld [vmem:[#allocation7 + $0x18] sm:$0xff]
    %v725 = vld [vmem:[#allocation7 + $0x20] sm:$0xff]
    %v726 = vld [vmem:[#allocation7 + $0x28] sm:$0xff]
    %v727 = vld [vmem:[#allocation7 + $0x30] sm:$0xff]
    %v728 = vld [vmem:[#allocation7 + $0x38] sm:$0xff]
    %v729 = vld [vmem:[#allocation7 + $0x40] sm:$0xff]
    %v730 = vld [vmem:[#allocation7 + $0x48] sm:$0xff]
    %v731 = vld [vmem:[#allocation7 + $0x50] sm:$0xff]
    %v732 = vld [vmem:[#allocation7 + $0x58] sm:$0xff]
    %v733 = vld [vmem:[#allocation7 + $0x60] sm:$0xff]
    %v734 = vld [vmem:[#allocation7 + $0x68] sm:$0xff]
    %v735 = vld [vmem:[#allocation7 + $0x70] sm:$0xff]
    %v736 = vld [vmem:[#allocation7 + $0x78] sm:$0xff]
    %v737 = vld [vmem:[%s5] sm:$0x1]
    %v739 = vlaneseq
    %v740 = vshrl.u32 %v739, 7
    %v741 = vsub.s32 0, %v740
    %v742 = vrot.slane %v737, %v741
    %744 = vmatprep.subr.mxu0 0.0
    %745 = vmatpush1.msra.mxu0 %v736
    %746 = vmatprep.subr.mxu0 0.0
    %747 = vmatpush1.msra.mxu0 %v735
    %748 = vmatprep.subr.mxu0 0.0
    %749 = vmatpush1.msra.mxu0 %v734
    %750 = vmatprep.subr.mxu0 0.0
    %751 = vmatpush1.msra.mxu0 %v733
    %752 = vmatprep.subr.mxu0 0.0
    %753 = vmatpush1.msra.mxu0 %v732
    %754 = vmatprep.subr.mxu0 0.0
    %755 = vmatpush1.msra.mxu0 %v731
    %756 = vmatprep.subr.mxu0 0.0
    %757 = vmatpush1.msra.mxu0 %v730
    %758 = vmatprep.subr.mxu0 0.0
    %759 = vmatpush1.msra.mxu0 %v729
    %760 = vmatprep.subr.mxu0 0.0
    %761 = vmatpush1.msra.mxu0 %v728
    %762 = vmatprep.subr.mxu0 0.0
    %763 = vmatpush1.msra.mxu0 %v727
    %764 = vmatprep.subr.mxu0 0.0
    %765 = vmatpush1.msra.mxu0 %v726
    %766 = vmatprep.subr.mxu0 0.0
    %767 = vmatpush1.msra.mxu0 %v725
    %768 = vmatprep.subr.mxu0 0.0
    %769 = vmatpush1.msra.mxu0 %v724
    %770 = vmatprep.subr.mxu0 0.0
    %771 = vmatpush1.msra.mxu0 %v723
    %772 = vmatprep.subr.mxu0 0.0
    %773 = vmatpush1.msra.mxu0 %v722
    %774 = vmatprep.subr.mxu0 0.0
    %775 = vmatpush1.msra.mxu0 %v721
    %776 = vmatprep.subr.mxu0 0.0
    %777 = vmatpush2.msra.mxu0 0.0
    %778 = vmatprep.subr.mxu0 0.0
    %779 = vmatpush2.msra.mxu0 0.0
    %780 = vmatprep.subr.mxu0 0.0
    %781 = vmatpush2.msra.mxu0 0.0
    %782 = vmatprep.subr.mxu0 0.0
    %783 = vmatpush2.msra.mxu0 0.0
    %784 = vmatprep.subr.mxu0 0.0
    %785 = vmatpush2.msra.mxu0 0.0
    %786 = vmatprep.subr.mxu0 0.0
    %787 = vmatpush2.msra.mxu0 0.0
    %788 = vmatprep.subr.mxu0 0.0
    %789 = vmatpush2.msra.mxu0 0.0
    %790 = vmatprep.subr.mxu0 0.0
    %791 = vmatpush2.msra.mxu0 0.0
    %792 = vmatprep.subr.mxu0 0.0
    %793 = vmatpush2.msra.mxu0 0.0
    %794 = vmatprep.subr.mxu0 0.0
    %795 = vmatpush2.msra.mxu0 0.0
    %796 = vmatprep.subr.mxu0 0.0
    %797 = vmatpush2.msra.mxu0 0.0
    %798 = vmatprep.subr.mxu0 0.0
    %799 = vmatpush2.msra.mxu0 0.0
    %800 = vmatprep.subr.mxu0 0.0
    %801 = vmatpush2.msra.mxu0 0.0
    %802 = vmatprep.subr.mxu0 0.0
    %803 = vmatpush2.msra.mxu0 0.0
    %804 = vmatprep.subr.mxu0 0.0
    %805 = vmatpush2.msra.mxu0 0.0
    %806 = vmatprep.subr.mxu0 0.0
    %807 = vmatpush2.msra.mxu0 0.0
    %808 = vmatprep.mubr.f32.mxu0 0.0
    %809 = vmatmul.mubr.f32.gmra.mxu0 %v714
    %v810 = vpop.f32.mrf.mxu0
    %v811 = vadd.f32 %v742, %v810
    %v812 = vpop.f32.mrf.mxu0
    %813 = vmatprep.mubr.f32.mxu0 0.0
    %814 = vmatmul.mubr.f32.gmra.mxu0 %v716
    %v815 = vpop.f32.mrf.mxu0
    %v816 = vadd.f32 %v742, %v815
    %v817 = vpop.f32.mrf.mxu0
    %818 = vmatprep.mubr.f32.mxu0 0.0
    %819 = vmatmul.mubr.f32.gmra.mxu0 %v718
    %v820 = vpop.f32.mrf.mxu0
    %v821 = vadd.f32 %v742, %v820
    %v822 = vpop.f32.mrf.mxu0
    %823 = vmatprep.mubr.f32.mxu0 0.0
    %824 = vmatmul.mubr.f32.gmra.mxu0 %v720
    %v825 = vpop.f32.mrf.mxu0
    %v826 = vadd.f32 %v742, %v825
    %v827 = vpop.f32.mrf.mxu0
    %828 = vdwg.mxu0
    %829 = vst [vmem:[#allocation8] sm:$0xff] %v811
    %830 = vst [vmem:[#allocation8 + $0x8] sm:$0xff] %v816
    %831 = vst [vmem:[#allocation8 + $0x10] sm:$0xff] %v821
    %832 = vst [vmem:[#allocation8 + $0x18] sm:$0xff] %v826
    // Predicated region
    $region46: #{mha_forward.1} parent=1 // pred_check
      _
    $region47: #{mha_forward.1} parent=1 // pred_check_branch
      %834 = sbr.rel (0) target = $region49
    $region48: #{mha_forward.1} parent=1 // pred_region
      %s836 = ssub.s32 512, 512
      %837 = vsyncadd [#allocation4], %s836
      %s838 = sshll.u32 [#allocation8], 4
      %s839 = int_to_ptr.vmem [resolvable:$true] %s838
      %844 = dma.vmem_to_hbm [thread:$0]  %s839, 512, %s8, [#allocation4], 128, 128, 8
    $region49: #{mha_forward.1} parent=1 // pred_fallthru
      _
    // Predicated region
    $region50: #{mha_forward.1} parent=1 // pred_check
      _
    $region51: #{mha_forward.1} parent=1 // pred_check_branch
      %846 = sbr.rel (0) target = $region53
    $region52: #{mha_forward.1} parent=1 // pred_region
      %847 = dma.done [#allocation4], 512
    $region53: #{mha_forward.1} parent=1 // pred_fallthru
      _
    %848 = vsyncpa [#allocation3], 1
    %849 = vsyncpa [#allocation6], 1
    %850 = vsyncpa [#allocation4], 1

</llo_original>
